<compile_context>
chip_gen: v7x
topology: tpu7x:2x2x1
jax: 0.10.0
libtpu: 0.0.40
codegen_flags: <defaults>
</compile_context>

<pallas_src>
import math
import jax
import jax.numpy as jnp
from jax.experimental import pallas as pl
from jax.experimental.pallas import tpu as pltpu

LANE = 128


def _round_up(x, m):
    return ((x + m - 1) // m) * m


def _head_kernel(k_ref, d_ref, w1a_ref, w1b_ref, b1_ref, w2_ref, b2_ref,
                 w3_ref, b3_ref, w4_ref, b4_ref, out_ref):
    """Fused head for one batch tile: 2x(TILE_B, D) f32 -> (TILE_B, CPAD) bf16.

    PyTorch's cat([knowledge, data]) @ W1 is computed as k @ W1[:D] + d @ W1[D:].
    Matmuls use bf16 operands with f32 accumulation on the MXU; bias adds and
    ReLU stay in f32 on the VPU (v5e has no bf16 VPU path).
    """
    k = k_ref[...].astype(jnp.bfloat16)
    d = d_ref[...].astype(jnp.bfloat16)

    # linear[0]: Linear(2D -> 4D) + ReLU   (concat fused as two K=D pushes)
    h1 = (jnp.dot(k, w1a_ref[...], preferred_element_type=jnp.float32)
          + jnp.dot(d, w1b_ref[...], preferred_element_type=jnp.float32)
          + b1_ref[...])
    h1 = jnp.maximum(h1, 0.0).astype(jnp.bfloat16)

    # linear[2]: Linear(4D -> D) + ReLU            (output lane-padded to 128)
    h2 = jnp.dot(h1, w2_ref[...], preferred_element_type=jnp.float32) + b2_ref[...]
    h2 = jnp.maximum(h2, 0.0).astype(jnp.bfloat16)

    # logits[0]: Linear(D -> D//4) + ReLU          (output lane-padded to 128)
    h3 = jnp.dot(h2, w3_ref[...], preferred_element_type=jnp.float32) + b3_ref[...]
    h3 = jnp.maximum(h3, 0.0).astype(jnp.bfloat16)

    # logits[2]: Linear(D//4 -> C)                 (output lane-padded to 128)
    out = jnp.dot(h3, w4_ref[...], preferred_element_type=jnp.float32) + b4_ref[...]
    out_ref[...] = out.astype(out_ref.dtype)


def survpath_head(knowledge_emb, data, params, num_classes, tile_b=256):
    """knowledge_emb, data: (B, D) float32.  Returns logits (B, num_classes) f32.

    NOTE: PyTorch's final .squeeze(0) drops the size-1 leading dim; here we
    always return (B, num_classes)."""
    B, D = knowledge_emb.shape
    assert data.shape == (B, D)
    d4p = params["w1a"].shape[1]      # padded 4D lanes
    dpad = params["w2"].shape[1]      # padded D lanes
    hpad = params["w3"].shape[1]      # padded D//4 lanes
    cpad = params["w4"].shape[1]      # padded num_classes lanes

    # batch tile: multiple of 16 (bf16 sublane packing).  Once B > 16, split
    # into >= 2 tiles so the "parallel" grid axis can use both v7x TCs.
    tb = min(tile_b, _round_up(B, 16))
    if B > 16:
        tb = min(tb, _round_up(-(-B // 2), 16))
    B_pad = _round_up(B, tb)
    if B_pad != B:        # tiny (B, D) pads; rows are fully independent
        knowledge_emb = jnp.pad(knowledge_emb, ((0, B_pad - B), (0, 0)))
        data = jnp.pad(data, ((0, B_pad - B), (0, 0)))

    const = lambda i: (0, 0)          # weights/biases stay VMEM-resident
    w_bytes = 2 * (2 * D * d4p + d4p * dpad + dpad * hpad + hpad * cpad)
    big = w_bytes > (8 << 20)         # only trips once D grows (>= ~512)
    wkw = dict(pipeline_mode=pl.Buffered(1)) if big else {}
    cparams = dict(dimension_semantics=("parallel",))
    if big:
        cparams["vmem_limit_bytes"] = min(w_bytes + (16 << 20), 64 << 20)

    out = pl.pallas_call(
        _head_kernel,
        out_shape=jax.ShapeDtypeStruct((B_pad, cpad), jnp.bfloat16),
        grid=(B_pad // tb,),
        in_specs=[
            pl.BlockSpec((tb, D), lambda i: (i, 0)),      # knowledge tile (f32)
            pl.BlockSpec((tb, D), lambda i: (i, 0)),      # data tile      (f32)
            pl.BlockSpec((D, d4p), const, **wkw),         # W1[:D]  (bf16)
            pl.BlockSpec((D, d4p), const, **wkw),         # W1[D:]  (bf16)
            pl.BlockSpec((1, d4p), const, **wkw),         # b1      (f32)
            pl.BlockSpec((d4p, dpad), const, **wkw),      # W2      (bf16)
            pl.BlockSpec((1, dpad), const, **wkw),        # b2      (f32)
            pl.BlockSpec((dpad, hpad), const, **wkw),     # W3      (bf16)
            pl.BlockSpec((1, hpad), const, **wkw),        # b3      (f32)
            pl.BlockSpec((hpad, cpad), const, **wkw),     # W4      (bf16)
            pl.BlockSpec((1, cpad), const, **wkw),        # b4      (f32)
        ],
        out_specs=pl.BlockSpec((tb, cpad), lambda i: (i, 0)),
        compiler_params=pltpu.CompilerParams(**cparams),
    )(knowledge_emb, data,
      params["w1a"], params["w1b"], params["b1"],
      params["w2"], params["b2"], params["w3"], params["b3"],
      params["w4"], params["b4"])

    # drop batch/lane padding; return f32 logits like the PyTorch head
    # (final (B, C) slice/cast is negligible next to the padded bf16 block).
    return out[:B, :num_classes].astype(jnp.float32)


def _torch_linear_init(key, fan_in, fan_out):
    """nn.Linear default init: U(-1/sqrt(in), 1/sqrt(in)).
    Returns (W of shape (in, out) = torch_W.T, b of shape (1, out))."""
    kw, kb = jax.random.split(key)
    bound = 1.0 / math.sqrt(fan_in)
    w = jax.random.uniform(kw, (fan_in, fan_out), jnp.float32, -bound, bound)
    b = jax.random.uniform(kb, (1, fan_out), jnp.float32, -bound, bound)
    return w, b


def make_params(key, out_dim_p, num_classes):
    D = out_dim_p
    d4 = 4 * D
    h = D // 4
    d4p = _round_up(d4, LANE)
    dpad = _round_up(D, LANE)
    hpad = _round_up(h, LANE)
    cpad = _round_up(num_classes, LANE)

    k1, k2, k3, k4 = jax.random.split(key, 4)
    w1, b1 = _torch_linear_init(k1, 2 * D, d4)          # Linear(2D, 4D)
    w2, b2 = _torch_linear_init(k2, d4, D)              # Linear(4D, D)
    w3, b3 = _torch_linear_init(k3, D, h)               # Linear(D, D//4)
    w4, b4 = _torch_linear_init(k4, h, num_classes)     # Linear(D//4, C)

    # split W1 into knowledge / data halves (concat is fused into the kernel).
    w1a, w1b = w1[:D], w1[D:]

    # zero-pad all narrow dims to 128 lanes: padded columns have zero weight
    # and zero bias, so ReLU(0)=0 and the padding never affects real logits;
    # padded input rows multiply zeroed activations and contribute nothing.
    w1a = jnp.pad(w1a, ((0, 0), (0, d4p - d4)))
    w1b = jnp.pad(w1b, ((0, 0), (0, d4p - d4)))
    b1p = jnp.pad(b1, ((0, 0), (0, d4p - d4)))
    w2p = jnp.pad(w2, ((0, d4p - d4), (0, dpad - D)))
    b2p = jnp.pad(b2, ((0, 0), (0, dpad - D)))
    w3p = jnp.pad(w3, ((0, dpad - D), (0, hpad - h)))
    b3p = jnp.pad(b3, ((0, 0), (0, hpad - h)))
    w4p = jnp.pad(w4, ((0, hpad - h), (0, cpad - num_classes)))
    b4p = jnp.pad(b4, ((0, 0), (0, cpad - num_classes)))

    return {
        "w1a": w1a.astype(jnp.bfloat16), "w1b": w1b.astype(jnp.bfloat16),
        "b1": b1p,
        "w2": w2p.astype(jnp.bfloat16), "b2": b2p,
        "w3": w3p.astype(jnp.bfloat16), "b3": b3p,
        "w4": w4p.astype(jnp.bfloat16), "b4": b4p,
    }


if __name__ == "__main__":
    # Small, forward-consistent shapes.
    B = 2            # batch (number of slides)
    D = 64           # model_p.out_dim_p
    C = 4            # num_classes

    key = jax.random.PRNGKey(0)
    k_knowledge, k_data, k_params = jax.random.split(key, 3)

    # TODO(synk): model_p.forward_p (frozen external backbone) is undefined in
    # the reference source — its (B, D) output is modeled as a synthetic input.
    data = jax.random.normal(k_data, (B, D), jnp.float32)

    # TODO(synk): CPKSModel + pandas CSV knowledge lookup (file I/O, string
    # matching) have no Pallas equivalent; the resulting (B, D) knowledge
    # embedding is modeled as a synthetic input.
    knowledge_emb = jax.random.normal(k_knowledge, (B, D), jnp.float32)

    params = make_params(k_params, D, C)

    logits = survpath_head(knowledge_emb, data, params, C)
    logits = jax.block_until_ready(logits)

    # Pure-JAX reference using the same bf16-operand / f32-accumulate math
    # (weights are bf16, so logits deviate from a pure-f32 PyTorch model at
    # ~1e-2 level; acceptable for survival-risk logits).
    kb = knowledge_emb.astype(jnp.bfloat16)
    db = data.astype(jnp.bfloat16)
    h = jnp.maximum(
        jnp.dot(kb, params["w1a"], preferred_element_type=jnp.float32)
        + jnp.dot(db, params["w1b"], preferred_element_type=jnp.float32)
        + params["b1"], 0.0).astype(jnp.bfloat16)
    h = jnp.maximum(jnp.dot(h, params["w2"], preferred_element_type=jnp.float32)
                    + params["b2"], 0.0).astype(jnp.bfloat16)
    h = jnp.maximum(jnp.dot(h, params["w3"], preferred_element_type=jnp.float32)
                    + params["b3"], 0.0).astype(jnp.bfloat16)
    ref = (jnp.dot(h, params["w4"], preferred_element_type=jnp.float32)
           + params["b4"]).astype(jnp.bfloat16)[:, :C].astype(jnp.float32)

    assert logits.shape == (B, C)
    assert jnp.allclose(logits, ref, atol=1e-2, rtol=1e-2), (logits, ref)

    print("KERNEL_OK")
</pallas_src>

<mosaic_0001>
module attributes {stable_mosaic.version = 11 : i64} {
  func.func @_head_kernel(%arg0: i32, %arg1: memref<16x64xf32, #tpu.memory_space<vmem>>, %arg2: memref<16x64xf32, #tpu.memory_space<vmem>>, %arg3: memref<64x256xbf16, #tpu.memory_space<vmem>>, %arg4: memref<64x256xbf16, #tpu.memory_space<vmem>>, %arg5: memref<1x256xf32, #tpu.memory_space<vmem>>, %arg6: memref<256x128xbf16, #tpu.memory_space<vmem>>, %arg7: memref<1x128xf32, #tpu.memory_space<vmem>>, %arg8: memref<128x128xbf16, #tpu.memory_space<vmem>>, %arg9: memref<1x128xf32, #tpu.memory_space<vmem>>, %arg10: memref<128x128xbf16, #tpu.memory_space<vmem>>, %arg11: memref<1x128xf32, #tpu.memory_space<vmem>>, %arg12: memref<16x128xbf16, #tpu.memory_space<vmem>>) attributes {dimension_semantics = [#tpu.dimension_semantics<parallel>], iteration_bounds = array<i64: 1>, scalar_prefetch = 0 : i64, scratch_operands = 0 : i64, tpu.core_type = #tpu.core_type<tc>, window_params = [{transform_indices = @transform_0, window_bounds = array<i64: 16, 64>}, {transform_indices = @transform_1, window_bounds = array<i64: 16, 64>}, {pipeline_mode = #tpu.pipeline_mode<synchronous>, transform_indices = @transform_2, window_bounds = array<i64: 64, 256>}, {pipeline_mode = #tpu.pipeline_mode<synchronous>, transform_indices = @transform_3, window_bounds = array<i64: 64, 256>}, {pipeline_mode = #tpu.pipeline_mode<synchronous>, transform_indices = @transform_4, window_bounds = array<i64: 1, 256>}, {pipeline_mode = #tpu.pipeline_mode<synchronous>, transform_indices = @transform_5, window_bounds = array<i64: 256, 128>}, {pipeline_mode = #tpu.pipeline_mode<synchronous>, transform_indices = @transform_6, window_bounds = array<i64: 1, 128>}, {pipeline_mode = #tpu.pipeline_mode<synchronous>, transform_indices = @transform_7, window_bounds = array<i64: 128, 128>}, {pipeline_mode = #tpu.pipeline_mode<synchronous>, transform_indices = @transform_8, window_bounds = array<i64: 1, 128>}, {pipeline_mode = #tpu.pipeline_mode<synchronous>, transform_indices = @transform_9, window_bounds = array<i64: 128, 128>}, {pipeline_mode = #tpu.pipeline_mode<synchronous>, transform_indices = @transform_10, window_bounds = array<i64: 1, 128>}, {transform_indices = @transform_11, window_bounds = array<i64: 16, 128>}]} {
    %c0 = arith.constant 0 : index
    %c0_0 = arith.constant 0 : index
    %0 = vector.load %arg1[%c0, %c0_0] : memref<16x64xf32, #tpu.memory_space<vmem>>, vector<16x64xf32>
    %1 = arith.truncf %0 : vector<16x64xf32> to vector<16x64xbf16>
    %c0_1 = arith.constant 0 : index
    %c0_2 = arith.constant 0 : index
    %2 = vector.load %arg2[%c0_1, %c0_2] : memref<16x64xf32, #tpu.memory_space<vmem>>, vector<16x64xf32>
    %3 = arith.truncf %2 : vector<16x64xf32> to vector<16x64xbf16>
    %c0_3 = arith.constant 0 : index
    %c0_4 = arith.constant 0 : index
    %4 = vector.load %arg3[%c0_3, %c0_4] : memref<64x256xbf16, #tpu.memory_space<vmem>>, vector<64x256xbf16>
    %cst = arith.constant dense<0.000000e+00> : vector<16x256xf32>
    %5 = tpu.matmul %1, %4, %cst {dimension_numbers = #tpu.dot_dimension_numbers<[1], [0], [0], [1], [0, 0, 1, 1], [], []>} : vector<16x64xbf16>, vector<64x256xbf16>, vector<16x256xf32> -> vector<16x256xf32>
    %c0_5 = arith.constant 0 : index
    %c0_6 = arith.constant 0 : index
    %6 = vector.load %arg4[%c0_5, %c0_6] : memref<64x256xbf16, #tpu.memory_space<vmem>>, vector<64x256xbf16>
    %cst_7 = arith.constant dense<0.000000e+00> : vector<16x256xf32>
    %7 = tpu.matmul %3, %6, %cst_7 {dimension_numbers = #tpu.dot_dimension_numbers<[1], [0], [0], [1], [0, 0, 1, 1], [], []>} : vector<16x64xbf16>, vector<64x256xbf16>, vector<16x256xf32> -> vector<16x256xf32>
    %8 = arith.addf %5, %7 : vector<16x256xf32>
    %c0_8 = arith.constant 0 : index
    %c0_9 = arith.constant 0 : index
    %9 = vector.load %arg5[%c0_8, %c0_9] : memref<1x256xf32, #tpu.memory_space<vmem>>, vector<1x256xf32>
    %10 = vector.broadcast %9 : vector<1x256xf32> to vector<16x256xf32>
    %11 = arith.addf %8, %10 : vector<16x256xf32>
    %cst_10 = arith.constant 0.000000e+00 : f32
    %12 = vector.broadcast %cst_10 : f32 to vector<16x256xf32>
    %13 = arith.maximumf %11, %12 : vector<16x256xf32>
    %14 = arith.truncf %13 : vector<16x256xf32> to vector<16x256xbf16>
    %c0_11 = arith.constant 0 : index
    %c0_12 = arith.constant 0 : index
    %15 = vector.load %arg6[%c0_11, %c0_12] : memref<256x128xbf16, #tpu.memory_space<vmem>>, vector<256x128xbf16>
    %cst_13 = arith.constant dense<0.000000e+00> : vector<16x128xf32>
    %16 = tpu.matmul %14, %15, %cst_13 {dimension_numbers = #tpu.dot_dimension_numbers<[1], [0], [0], [1], [0, 0, 1, 1], [], []>} : vector<16x256xbf16>, vector<256x128xbf16>, vector<16x128xf32> -> vector<16x128xf32>
    %c0_14 = arith.constant 0 : index
    %c0_15 = arith.constant 0 : index
    %17 = vector.load %arg7[%c0_14, %c0_15] : memref<1x128xf32, #tpu.memory_space<vmem>>, vector<1x128xf32>
    %18 = vector.broadcast %17 : vector<1x128xf32> to vector<16x128xf32>
    %19 = arith.addf %16, %18 : vector<16x128xf32>
    %cst_16 = arith.constant 0.000000e+00 : f32
    %20 = vector.broadcast %cst_16 : f32 to vector<16x128xf32>
    %21 = arith.maximumf %19, %20 : vector<16x128xf32>
    %22 = arith.truncf %21 : vector<16x128xf32> to vector<16x128xbf16>
    %c0_17 = arith.constant 0 : index
    %c0_18 = arith.constant 0 : index
    %23 = vector.load %arg8[%c0_17, %c0_18] : memref<128x128xbf16, #tpu.memory_space<vmem>>, vector<128x128xbf16>
    %cst_19 = arith.constant dense<0.000000e+00> : vector<16x128xf32>
    %24 = tpu.matmul %22, %23, %cst_19 {dimension_numbers = #tpu.dot_dimension_numbers<[1], [0], [0], [1], [0, 0, 1, 1], [], []>} : vector<16x128xbf16>, vector<128x128xbf16>, vector<16x128xf32> -> vector<16x128xf32>
    %c0_20 = arith.constant 0 : index
    %c0_21 = arith.constant 0 : index
    %25 = vector.load %arg9[%c0_20, %c0_21] : memref<1x128xf32, #tpu.memory_space<vmem>>, vector<1x128xf32>
    %26 = vector.broadcast %25 : vector<1x128xf32> to vector<16x128xf32>
    %27 = arith.addf %24, %26 : vector<16x128xf32>
    %cst_22 = arith.constant 0.000000e+00 : f32
    %28 = vector.broadcast %cst_22 : f32 to vector<16x128xf32>
    %29 = arith.maximumf %27, %28 : vector<16x128xf32>
    %30 = arith.truncf %29 : vector<16x128xf32> to vector<16x128xbf16>
    %c0_23 = arith.constant 0 : index
    %c0_24 = arith.constant 0 : index
    %31 = vector.load %arg10[%c0_23, %c0_24] : memref<128x128xbf16, #tpu.memory_space<vmem>>, vector<128x128xbf16>
    %cst_25 = arith.constant dense<0.000000e+00> : vector<16x128xf32>
    %32 = tpu.matmul %30, %31, %cst_25 {dimension_numbers = #tpu.dot_dimension_numbers<[1], [0], [0], [1], [0, 0, 1, 1], [], []>} : vector<16x128xbf16>, vector<128x128xbf16>, vector<16x128xf32> -> vector<16x128xf32>
    %c0_26 = arith.constant 0 : index
    %c0_27 = arith.constant 0 : index
    %33 = vector.load %arg11[%c0_26, %c0_27] : memref<1x128xf32, #tpu.memory_space<vmem>>, vector<1x128xf32>
    %34 = vector.broadcast %33 : vector<1x128xf32> to vector<16x128xf32>
    %35 = arith.addf %32, %34 : vector<16x128xf32>
    %36 = arith.truncf %35 : vector<16x128xf32> to vector<16x128xbf16>
    %c0_28 = arith.constant 0 : index
    %c0_29 = arith.constant 0 : index
    %37 = vector.load %arg12[%c0_28, %c0_29] : memref<16x128xbf16, #tpu.memory_space<vmem>>, vector<16x128xbf16>
    tpu.vector_store %arg12[%c0_28, %c0_29], %36 {strides = array<i32>} : memref<16x128xbf16, #tpu.memory_space<vmem>>, vector<16x128xbf16>,
    return
  }
  func.func @transform_0(%arg0: i32) -> (i32, i32) {
    %c0_i32 = arith.constant 0 : i32
    %c0_i32_0 = arith.constant 0 : i32
    return %arg0, %c0_i32 : i32, i32
  }
  func.func @transform_1(%arg0: i32) -> (i32, i32) {
    %c0_i32 = arith.constant 0 : i32
    %c0_i32_0 = arith.constant 0 : i32
    return %arg0, %c0_i32 : i32, i32
  }
  func.func @transform_2(%arg0: i32) -> (i32, i32) {
    %c0_i32 = arith.constant 0 : i32
    %c0_i32_0 = arith.constant 0 : i32
    %c0_i32_1 = arith.constant 0 : i32
    return %c0_i32, %c0_i32_0 : i32, i32
  }
  func.func @transform_3(%arg0: i32) -> (i32, i32) {
    %c0_i32 = arith.constant 0 : i32
    %c0_i32_0 = arith.constant 0 : i32
    %c0_i32_1 = arith.constant 0 : i32
    return %c0_i32, %c0_i32_0 : i32, i32
  }
  func.func @transform_4(%arg0: i32) -> (i32, i32) {
    %c0_i32 = arith.constant 0 : i32
    %c0_i32_0 = arith.constant 0 : i32
    %c0_i32_1 = arith.constant 0 : i32
    return %c0_i32, %c0_i32_0 : i32, i32
  }
  func.func @transform_5(%arg0: i32) -> (i32, i32) {
    %c0_i32 = arith.constant 0 : i32
    %c0_i32_0 = arith.constant 0 : i32
    %c0_i32_1 = arith.constant 0 : i32
    return %c0_i32, %c0_i32_0 : i32, i32
  }
  func.func @transform_6(%arg0: i32) -> (i32, i32) {
    %c0_i32 = arith.constant 0 : i32
    %c0_i32_0 = arith.constant 0 : i32
    %c0_i32_1 = arith.constant 0 : i32
    return %c0_i32, %c0_i32_0 : i32, i32
  }
  func.func @transform_7(%arg0: i32) -> (i32, i32) {
    %c0_i32 = arith.constant 0 : i32
    %c0_i32_0 = arith.constant 0 : i32
    %c0_i32_1 = arith.constant 0 : i32
    return %c0_i32, %c0_i32_0 : i32, i32
  }
  func.func @transform_8(%arg0: i32) -> (i32, i32) {
    %c0_i32 = arith.constant 0 : i32
    %c0_i32_0 = arith.constant 0 : i32
    %c0_i32_1 = arith.constant 0 : i32
    return %c0_i32, %c0_i32_0 : i32, i32
  }
  func.func @transform_9(%arg0: i32) -> (i32, i32) {
    %c0_i32 = arith.constant 0 : i32
    %c0_i32_0 = arith.constant 0 : i32
    %c0_i32_1 = arith.constant 0 : i32
    return %c0_i32, %c0_i32_0 : i32, i32
  }
  func.func @transform_10(%arg0: i32) -> (i32, i32) {
    %c0_i32 = arith.constant 0 : i32
    %c0_i32_0 = arith.constant 0 : i32
    %c0_i32_1 = arith.constant 0 : i32
    return %c0_i32, %c0_i32_0 : i32, i32
  }
  func.func @transform_11(%arg0: i32) -> (i32, i32) {
    %c0_i32 = arith.constant 0 : i32
    %c0_i32_0 = arith.constant 0 : i32
    return %arg0, %c0_i32 : i32, i32
  }
}

</mosaic_0001>

<llo_original>
// kernel: tpu_custom_call.1
$region0: #{tpu_custom_call.1}
  #allocation0 [shape = 'u32[]', space=smem, size = 0x4, offset = 0x4, fixed_abs, tag = 'smem constant byte address 0x4 - core index']
  #allocation1 [shape = 'u32[144,128]{1,0:T(1,128)}', space=vmem, size = 0x12000, scoped, tag = 'internal scratch']
  %s0 = inlined_call_operand.hbm [shape: f32[16,64], index: 0, kind: input, shape index: {}]
  %s1 = inlined_call_operand.hbm [shape: f32[16,64], index: 1, kind: input, shape index: {}]
  %s2 = inlined_call_operand.hbm [shape: bf16[64,256], index: 2, kind: input, shape index: {}]
  %s3 = inlined_call_operand.hbm [shape: bf16[64,256], index: 3, kind: input, shape index: {}]
  %s4 = inlined_call_operand.vmem [shape: f32[1,256], index: 4, kind: input, shape index: {}]
  %s5 = inlined_call_operand.hbm [shape: bf16[256,128], index: 5, kind: input, shape index: {}]
  %s6 = inlined_call_operand.vmem [shape: f32[1,128], index: 6, kind: input, shape index: {}]
  %s7 = inlined_call_operand.hbm [shape: bf16[128,128], index: 7, kind: input, shape index: {}]
  %s8 = inlined_call_operand.vmem [shape: f32[1,128], index: 8, kind: input, shape index: {}]
  %s9 = inlined_call_operand.hbm [shape: bf16[128,128], index: 9, kind: input, shape index: {}]
  %s10 = inlined_call_operand.vmem [shape: f32[1,128], index: 10, kind: input, shape index: {}]
  %s11 = inlined_call_operand.hbm [shape: bf16[16,128], index: 11, kind: output, shape index: {}]
  %s12 = sld [smem:[#allocation0]]
  $region82: #{tpu_custom_call.1} parent=0
    _
  %s14 = ssub.s32 1, %s12
  %s15 = scalar_select 0, %s14, %s12
  $region1: #{tpu_custom_call.1} parent=0
    #allocation2 [shape = 'u8[8192]{0}', space=vmem, size = 0x2000, scoped, tag = 'input window, operand 0, single buffered']
    #allocation3 [shape = 's32[1]{0}', space=sflag, size = 0x4, scoped, tag = 'scoped memory for tpu_custom_call.1']
    #allocation4 [shape = 's32[1]{0}', space=sflag, size = 0x4, scoped, tag = 'scoped memory for tpu_custom_call.1']
    #allocation5 [shape = 'u8[8192]{0}', space=vmem, size = 0x2000, scoped, tag = 'input window, operand 1, single buffered']
    #allocation6 [shape = 's32[1]{0}', space=sflag, size = 0x4, scoped, tag = 'scoped memory for tpu_custom_call.1']
    #allocation7 [shape = 'u8[32768]{0}', space=vmem, size = 0x8000, scoped, tag = 'input window, operand 2, single buffered']
    #allocation8 [shape = 'u8[32768]{0}', space=vmem, size = 0x8000, scoped, tag = 'input window, operand 3, single buffered']
    #allocation9 [shape = 's32[1]{0}', space=sflag, size = 0x4, scoped, tag = 'scoped memory for tpu_custom_call.1']
    #allocation10 [shape = 'u8[65536]{0}', space=vmem, size = 0x10000, scoped, tag = 'input window, operand 5, single buffered']
    #allocation11 [shape = 'u8[32768]{0}', space=vmem, size = 0x8000, scoped, tag = 'input window, operand 7, single buffered']
    #allocation12 [shape = 's32[1]{0}', space=sflag, size = 0x4, scoped, tag = 'scoped memory for tpu_custom_call.1']
    #allocation13 [shape = 'u8[32768]{0}', space=vmem, size = 0x8000, scoped, tag = 'input window, operand 9, single buffered']
    #allocation14 [shape = 'u8[4096]{0}', space=vmem, size = 0x1000, scoped, tag = 'output window, operand 0, single buffered']
    %16 = vsyncpa [#allocation3], 0
    %17 = vsyncpa [#allocation6], 0
    %18 = vsyncpa [#allocation9], 0
    %19 = vsyncpa [#allocation12], 0
    %20 = vsyncpa [#allocation4], 0
    // Predicated region
    $region2: #{tpu_custom_call.1} parent=1 // pred_check
      _
    $region3: #{tpu_custom_call.1} parent=1 // pred_check_branch
      %22 = sbr.rel (0) target = $region5
    $region4: #{tpu_custom_call.1} parent=1 // pred_region
      %s24 = ssub.s32 256, 256
      %25 = vsyncadd [#allocation3], %s24
      %s26 = sshll.u32 [#allocation2], 4
      %s27 = int_to_ptr.vmem [resolvable:$true] %s26
      %32 = dma.hbm_to_vmem [thread:$0]  %s0, 256, %s27, [#allocation3], 128, 128, 8
    $region5: #{tpu_custom_call.1} parent=1 // pred_fallthru
      _
    // Predicated region
    $region6: #{tpu_custom_call.1} parent=1 // pred_check
      _
    $region7: #{tpu_custom_call.1} parent=1 // pred_check_branch
      %34 = sbr.rel (0) target = $region9
    $region8: #{tpu_custom_call.1} parent=1 // pred_region
      %s36 = ssub.s32 256, 256
      %37 = vsyncadd [#allocation6], %s36
      %s38 = sshll.u32 [#allocation5], 4
      %s39 = int_to_ptr.vmem [resolvable:$true] %s38
      %44 = dma.hbm_to_vmem [thread:$0]  %s1, 256, %s39, [#allocation6], 128, 128, 8
    $region9: #{tpu_custom_call.1} parent=1 // pred_fallthru
      _
    // Predicated region
    $region10: #{tpu_custom_call.1} parent=1 // pred_check
      _
    $region11: #{tpu_custom_call.1} parent=1 // pred_check_branch
      %46 = sbr.rel (0) target = $region13
    $region12: #{tpu_custom_call.1} parent=1 // pred_region
      %s48 = ssub.s32 1024, 1024
      %49 = vsyncadd [#allocation6], %s48
      %s50 = sshll.u32 [#allocation7], 4
      %s51 = int_to_ptr.vmem [resolvable:$true] %s50
      %56 = dma.hbm_to_vmem [thread:$0]  %s2, 1024, %s51, [#allocation6], 128, 128, 8
    $region13: #{tpu_custom_call.1} parent=1 // pred_fallthru
      _
    // Predicated region
    $region14: #{tpu_custom_call.1} parent=1 // pred_check
      _
    $region15: #{tpu_custom_call.1} parent=1 // pred_check_branch
      %58 = sbr.rel (0) target = $region17
    $region16: #{tpu_custom_call.1} parent=1 // pred_region
      %s60 = ssub.s32 1024, 1024
      %61 = vsyncadd [#allocation9], %s60
      %s62 = sshll.u32 [#allocation8], 4
      %s63 = int_to_ptr.vmem [resolvable:$true] %s62
      %68 = dma.hbm_to_vmem [thread:$0]  %s3, 1024, %s63, [#allocation9], 128, 128, 8
    $region17: #{tpu_custom_call.1} parent=1 // pred_fallthru
      _
    // Predicated region
    $region18: #{tpu_custom_call.1} parent=1 // pred_check
      _
    $region19: #{tpu_custom_call.1} parent=1 // pred_check_branch
      %70 = sbr.rel (0) target = $region21
    $region20: #{tpu_custom_call.1} parent=1 // pred_region
      _
    $region21: #{tpu_custom_call.1} parent=1 // pred_fallthru
      _
    // Predicated region
    $region22: #{tpu_custom_call.1} parent=1 // pred_check
      _
    $region23: #{tpu_custom_call.1} parent=1 // pred_check_branch
      %72 = sbr.rel (0) target = $region25
    $region24: #{tpu_custom_call.1} parent=1 // pred_region
      %s74 = ssub.s32 2048, 2048
      %75 = vsyncadd [#allocation9], %s74
      %s76 = sshll.u32 [#allocation10], 4
      %s77 = int_to_ptr.vmem [resolvable:$true] %s76
      %82 = dma.hbm_to_vmem [thread:$0]  %s5, 2048, %s77, [#allocation9], 64, 64, 4
    $region25: #{tpu_custom_call.1} parent=1 // pred_fallthru
      _
    // Predicated region
    $region26: #{tpu_custom_call.1} parent=1 // pred_check
      _
    $region27: #{tpu_custom_call.1} parent=1 // pred_check_branch
      %84 = sbr.rel (0) target = $region29
    $region28: #{tpu_custom_call.1} parent=1 // pred_region
      _
    $region29: #{tpu_custom_call.1} parent=1 // pred_fallthru
      _
    // Predicated region
    $region30: #{tpu_custom_call.1} parent=1 // pred_check
      _
    $region31: #{tpu_custom_call.1} parent=1 // pred_check_branch
      %86 = sbr.rel (0) target = $region33
    $region32: #{tpu_custom_call.1} parent=1 // pred_region
      %s88 = ssub.s32 1024, 1024
      %89 = vsyncadd [#allocation12], %s88
      %s90 = sshll.u32 [#allocation11], 4
      %s91 = int_to_ptr.vmem [resolvable:$true] %s90
      %96 = dma.hbm_to_vmem [thread:$0]  %s7, 1024, %s91, [#allocation12], 64, 64, 4
    $region33: #{tpu_custom_call.1} parent=1 // pred_fallthru
      _
    // Predicated region
    $region34: #{tpu_custom_call.1} parent=1 // pred_check
      _
    $region35: #{tpu_custom_call.1} parent=1 // pred_check_branch
      %98 = sbr.rel (0) target = $region37
    $region36: #{tpu_custom_call.1} parent=1 // pred_region
      _
    $region37: #{tpu_custom_call.1} parent=1 // pred_fallthru
      _
    // Predicated region
    $region38: #{tpu_custom_call.1} parent=1 // pred_check
      _
    $region39: #{tpu_custom_call.1} parent=1 // pred_check_branch
      %100 = sbr.rel (0) target = $region41
    $region40: #{tpu_custom_call.1} parent=1 // pred_region
      %s102 = ssub.s32 1024, 1024
      %103 = vsyncadd [#allocation12], %s102
      %s104 = sshll.u32 [#allocation13], 4
      %s105 = int_to_ptr.vmem [resolvable:$true] %s104
      %110 = dma.hbm_to_vmem [thread:$0]  %s9, 1024, %s105, [#allocation12], 64, 64, 4
    $region41: #{tpu_custom_call.1} parent=1 // pred_fallthru
      _
    // Predicated region
    $region42: #{tpu_custom_call.1} parent=1 // pred_check
      _
    $region43: #{tpu_custom_call.1} parent=1 // pred_check_branch
      %112 = sbr.rel (0) target = $region45
    $region44: #{tpu_custom_call.1} parent=1 // pred_region
      _
    $region45: #{tpu_custom_call.1} parent=1 // pred_fallthru
      _
    // Predicated region
    $region46: #{tpu_custom_call.1} parent=1 // pred_check
      _
    $region47: #{tpu_custom_call.1} parent=1 // pred_check_branch
      %114 = sbr.rel (0) target = $region49
    $region48: #{tpu_custom_call.1} parent=1 // pred_region
      %115 = dma.done [#allocation3], 256
    $region49: #{tpu_custom_call.1} parent=1 // pred_fallthru
      _
    // Predicated region
    $region50: #{tpu_custom_call.1} parent=1 // pred_check
      _
    $region51: #{tpu_custom_call.1} parent=1 // pred_check_branch
      %117 = sbr.rel (0) target = $region53
    $region52: #{tpu_custom_call.1} parent=1 // pred_region
      %118 = dma.done [#allocation6], 256
    $region53: #{tpu_custom_call.1} parent=1 // pred_fallthru
      _
    // Predicated region
    $region54: #{tpu_custom_call.1} parent=1 // pred_check
      _
    $region55: #{tpu_custom_call.1} parent=1 // pred_check_branch
      %120 = sbr.rel (0) target = $region57
    $region56: #{tpu_custom_call.1} parent=1 // pred_region
      %121 = dma.done [#allocation6], 1024
    $region57: #{tpu_custom_call.1} parent=1 // pred_fallthru
      _
    // Predicated region
    $region58: #{tpu_custom_call.1} parent=1 // pred_check
      _
    $region59: #{tpu_custom_call.1} parent=1 // pred_check_branch
      %123 = sbr.rel (0) target = $region61
    $region60: #{tpu_custom_call.1} parent=1 // pred_region
      %124 = dma.done [#allocation9], 1024
    $region61: #{tpu_custom_call.1} parent=1 // pred_fallthru
      _
    // Predicated region
    $region62: #{tpu_custom_call.1} parent=1 // pred_check
      _
    $region63: #{tpu_custom_call.1} parent=1 // pred_check_branch
      %126 = sbr.rel (0) target = $region65
    $region64: #{tpu_custom_call.1} parent=1 // pred_region
      %127 = dma.done [#allocation9], 2048
    $region65: #{tpu_custom_call.1} parent=1 // pred_fallthru
      _
    // Predicated region
    $region66: #{tpu_custom_call.1} parent=1 // pred_check
      _
    $region67: #{tpu_custom_call.1} parent=1 // pred_check_branch
      %129 = sbr.rel (0) target = $region69
    $region68: #{tpu_custom_call.1} parent=1 // pred_region
      %130 = dma.done [#allocation12], 1024
    $region69: #{tpu_custom_call.1} parent=1 // pred_fallthru
      _
    // Predicated region
    $region70: #{tpu_custom_call.1} parent=1 // pred_check
      _
    $region71: #{tpu_custom_call.1} parent=1 // pred_check_branch
      %132 = sbr.rel (0) target = $region73
    $region72: #{tpu_custom_call.1} parent=1 // pred_region
      %133 = dma.done [#allocation12], 1024
    $region73: #{tpu_custom_call.1} parent=1 // pred_fallthru
      _
    %v135 = vld [vmem:[#allocation2] sm:$0xff]
    %v136 = vld [vmem:[#allocation2 + $0x8] sm:$0xff]
    %v137 = vpack.c.bf16 %v136, %v135
    %v138 = vld [vmem:[#allocation5] sm:$0xff]
    %v139 = vld [vmem:[#allocation5 + $0x8] sm:$0xff]
    %v140 = vpack.c.bf16 %v139, %v138
    %v141 = vld [vmem:[#allocation7] sm:$0xff]
    %v142 = vld [vmem:[#allocation7 + $0x8] sm:$0xff]
    %v143 = vld [vmem:[#allocation7 + $0x10] sm:$0xff]
    %v144 = vld [vmem:[#allocation7 + $0x18] sm:$0xff]
    %v145 = vld [vmem:[#allocation7 + $0x20] sm:$0xff]
    %v146 = vld [vmem:[#allocation7 + $0x28] sm:$0xff]
    %v147 = vld [vmem:[#allocation7 + $0x30] sm:$0xff]
    %v148 = vld [vmem:[#allocation7 + $0x38] sm:$0xff]
    %v149 = vld [vmem:[#allocation8] sm:$0xff]
    %v150 = vld [vmem:[#allocation8 + $0x8] sm:$0xff]
    %v151 = vld [vmem:[#allocation8 + $0x10] sm:$0xff]
    %v152 = vld [vmem:[#allocation8 + $0x18] sm:$0xff]
    %v153 = vld [vmem:[#allocation8 + $0x20] sm:$0xff]
    %v154 = vld [vmem:[#allocation8 + $0x28] sm:$0xff]
    %v155 = vld [vmem:[#allocation8 + $0x30] sm:$0xff]
    %v156 = vld [vmem:[#allocation8 + $0x38] sm:$0xff]
    %v165 = vunpack.c.l.b16 %v149
    %v166 = vunpack.c.h.b16 %v149
    %v167 = vunpack.c.l.b16 %v150
    %v168 = vunpack.c.h.b16 %v150
    %v169 = vunpack.c.l.b16 %v151
    %v170 = vunpack.c.h.b16 %v151
    %v171 = vunpack.c.l.b16 %v152
    %v172 = vunpack.c.h.b16 %v152
    %v173 = vunpack.c.l.b16 %v153
    %v174 = vunpack.c.h.b16 %v153
    %v175 = vunpack.c.l.b16 %v154
    %v176 = vunpack.c.h.b16 %v154
    %v177 = vunpack.c.l.b16 %v155
    %v178 = vunpack.c.h.b16 %v155
    %v179 = vunpack.c.l.b16 %v156
    %v180 = vunpack.c.h.b16 %v156
    %v181 = vpack.c.b16 %v167, %v165
    %v182 = vpack.c.b16 %v168, %v166
    %v183 = vpack.c.b16 %v171, %v169
    %v184 = vpack.c.b16 %v172, %v170
    %v185 = vpack.c.b16 %v175, %v173
    %v186 = vpack.c.b16 %v176, %v174
    %v187 = vpack.c.b16 %v179, %v177
    %v188 = vpack.c.b16 %v180, %v178
    %vm197 = vcmask 523264
    %v199 = vsel %vm197, %v140, 0
    %201 = vmatprep.subr.bf16.mxu0 %v182
    %202 = vmatpush1.bf16.msra.mxu0 %v181
    %203 = vmatprep.subr.bf16.mxu0 %v184
    %204 = vmatpush1.bf16.msra.mxu0 %v183
    %205 = vmatprep.subr.bf16.mxu0 %v186
    %206 = vmatpush1.bf16.msra.mxu0 %v185
    %207 = vmatprep.subr.bf16.mxu0 %v188
    %208 = vmatpush1.bf16.msra.mxu0 %v187
    %209 = vmatprep.subr.bf16.mxu0 0
    %210 = vmatpush1.bf16.msra.mxu0 0
    %211 = vmatprep.subr.bf16.mxu0 0
    %212 = vmatpush1.bf16.msra.mxu0 0
    %213 = vmatprep.subr.bf16.mxu0 0
    %214 = vmatpush1.bf16.msra.mxu0 0
    %215 = vmatprep.subr.bf16.mxu0 0
    %216 = vmatpush1.bf16.msra.mxu0 0
    %217 = vmatprep.subr.bf16.mxu0 0
    %218 = vmatpush1.bf16.msra.mxu0 0
    %219 = vmatprep.subr.bf16.mxu0 0
    %220 = vmatpush1.bf16.msra.mxu0 0
    %221 = vmatprep.subr.bf16.mxu0 0
    %222 = vmatpush1.bf16.msra.mxu0 0
    %223 = vmatprep.subr.bf16.mxu0 0
    %224 = vmatpush1.bf16.msra.mxu0 0
    %225 = vmatprep.subr.bf16.mxu0 0
    %226 = vmatpush1.bf16.msra.mxu0 0
    %227 = vmatprep.subr.bf16.mxu0 0
    %228 = vmatpush1.bf16.msra.mxu0 0
    %229 = vmatprep.subr.bf16.mxu0 0
    %230 = vmatpush1.bf16.msra.mxu0 0
    %231 = vmatprep.subr.bf16.mxu0 0
    %232 = vmatpush1.bf16.msra.mxu0 0
    %233 = vmatprep.mubr.bf16.mxu0 0
    %234 = vmatmul.mubr.bf16.gmra.mrb[0].mxu0 %v199
    %v235 = vpop.f32.mrb[0].mxu0
    %v236 = vadd.f32 0.0, %v235
    %v237 = vpop.f32.mrb[0].mxu0
    %v238 = vadd.f32 0.0, %v237
    %v239 = vpop.f32.mrb[0].mxu0
    %v240 = vadd.f32 0.0, %v239
    %v241 = vpop.f32.mrb[0].mxu0
    %v242 = vadd.f32 0.0, %v241
    %243 = vdwg.mxu0
    %v252 = vunpack.c.l.b16 %v141
    %v253 = vunpack.c.h.b16 %v141
    %v254 = vunpack.c.l.b16 %v142
    %v255 = vunpack.c.h.b16 %v142
    %v256 = vunpack.c.l.b16 %v143
    %v257 = vunpack.c.h.b16 %v143
    %v258 = vunpack.c.l.b16 %v144
    %v259 = vunpack.c.h.b16 %v144
    %v260 = vunpack.c.l.b16 %v145
    %v261 = vunpack.c.h.b16 %v145
    %v262 = vunpack.c.l.b16 %v146
    %v263 = vunpack.c.h.b16 %v146
    %v264 = vunpack.c.l.b16 %v147
    %v265 = vunpack.c.h.b16 %v147
    %v266 = vunpack.c.l.b16 %v148
    %v267 = vunpack.c.h.b16 %v148
    %v268 = vpack.c.b16 %v254, %v252
    %v269 = vpack.c.b16 %v255, %v253
    %v270 = vpack.c.b16 %v258, %v256
    %v271 = vpack.c.b16 %v259, %v257
    %v272 = vpack.c.b16 %v262, %v260
    %v273 = vpack.c.b16 %v263, %v261
    %v274 = vpack.c.b16 %v266, %v264
    %v275 = vpack.c.b16 %v267, %v265
    %v285 = vsel %vm197, %v137, 0
    %287 = vmatprep.subr.bf16.mxu0 %v269
    %288 = vmatpush1.bf16.msra.mxu0 %v268
    %289 = vmatprep.subr.bf16.mxu0 %v271
    %290 = vmatpush1.bf16.msra.mxu0 %v270
    %291 = vmatprep.subr.bf16.mxu0 %v273
    %292 = vmatpush1.bf16.msra.mxu0 %v272
    %293 = vmatprep.subr.bf16.mxu0 %v275
    %294 = vmatpush1.bf16.msra.mxu0 %v274
    %295 = vmatprep.subr.bf16.mxu0 0
    %296 = vmatpush1.bf16.msra.mxu0 0
    %297 = vmatprep.subr.bf16.mxu0 0
    %298 = vmatpush1.bf16.msra.mxu0 0
    %299 = vmatprep.subr.bf16.mxu0 0
    %300 = vmatpush1.bf16.msra.mxu0 0
    %301 = vmatprep.subr.bf16.mxu0 0
    %302 = vmatpush1.bf16.msra.mxu0 0
    %303 = vmatprep.subr.bf16.mxu0 0
    %304 = vmatpush1.bf16.msra.mxu0 0
    %305 = vmatprep.subr.bf16.mxu0 0
    %306 = vmatpush1.bf16.msra.mxu0 0
    %307 = vmatprep.subr.bf16.mxu0 0
    %308 = vmatpush1.bf16.msra.mxu0 0
    %309 = vmatprep.subr.bf16.mxu0 0
    %310 = vmatpush1.bf16.msra.mxu0 0
    %311 = vmatprep.subr.bf16.mxu0 0
    %312 = vmatpush1.bf16.msra.mxu0 0
    %313 = vmatprep.subr.bf16.mxu0 0
    %314 = vmatpush1.bf16.msra.mxu0 0
    %315 = vmatprep.subr.bf16.mxu0 0
    %316 = vmatpush1.bf16.msra.mxu0 0
    %317 = vmatprep.subr.bf16.mxu0 0
    %318 = vmatpush1.bf16.msra.mxu0 0
    %319 = vmatprep.mubr.bf16.mxu0 0
    %320 = vmatmul.mubr.bf16.gmra.mrb[0].mxu0 %v285
    %v321 = vpop.f32.mrb[0].mxu0
    %v322 = vadd.f32 %v236, %v321
    %v323 = vpop.f32.mrb[0].mxu0
    %v324 = vadd.f32 %v238, %v323
    %v325 = vpop.f32.mrb[0].mxu0
    %v326 = vadd.f32 %v240, %v325
    %v327 = vpop.f32.mrb[0].mxu0
    %v328 = vadd.f32 %v242, %v327
    %329 = vdwg.mxu0
    %v330 = vld [vmem:[%s4] sm:$0x3]
    %v332 = vlaneseq
    %v333 = vshrl.u32 %v332, 7
    %v334 = vsub.s32 0, %v333
    %v335 = vrot.slane %v330, %v334
    %v336 = vlaneseq
    %v337 = vshrl.u32 %v336, 7
    %v338 = vsub.s32 1, %v337
    %v339 = vrot.slane %v330, %v338
    %v342 = vadd.f32 %v322, %v335
    %v343 = vadd.f32 %v324, %v339
    %v344 = vadd.f32 %v326, %v335
    %v345 = vadd.f32 %v328, %v339
    %v346 = vmax.f32 %v342, 0.0
    %v347 = vmax.f32 %v343, 0.0
    %v348 = vmax.f32 %v344, 0.0
    %v349 = vmax.f32 %v345, 0.0
    %v350 = vpack.c.bf16 %v348, %v346
    %v351 = vpack.c.bf16 %v349, %v347
    %v352 = vld [vmem:[#allocation10] sm:$0xf]
    %v353 = vld [vmem:[#allocation10 + $0x4] sm:$0xf]
    %v354 = vld [vmem:[#allocation10 + $0x8] sm:$0xf]
    %v355 = vld [vmem:[#allocation10 + $0xc] sm:$0xf]
    %v356 = vld [vmem:[#allocation10 + $0x10] sm:$0xf]
    %v357 = vld [vmem:[#allocation10 + $0x14] sm:$0xf]
    %v358 = vld [vmem:[#allocation10 + $0x18] sm:$0xf]
    %v359 = vld [vmem:[#allocation10 + $0x1c] sm:$0xf]
    %v360 = vld [vmem:[#allocation10 + $0x20] sm:$0xf]
    %v361 = vld [vmem:[#allocation10 + $0x24] sm:$0xf]
    %v362 = vld [vmem:[#allocation10 + $0x28] sm:$0xf]
    %v363 = vld [vmem:[#allocation10 + $0x2c] sm:$0xf]
    %v364 = vld [vmem:[#allocation10 + $0x30] sm:$0xf]
    %v365 = vld [vmem:[#allocation10 + $0x34] sm:$0xf]
    %v366 = vld [vmem:[#allocation10 + $0x38] sm:$0xf]
    %v367 = vld [vmem:[#allocation10 + $0x3c] sm:$0xf]
    %v368 = vld [vmem:[#allocation10 + $0x40] sm:$0xf]
    %v369 = vld [vmem:[#allocation10 + $0x44] sm:$0xf]
    %v370 = vld [vmem:[#allocation10 + $0x48] sm:$0xf]
    %v371 = vld [vmem:[#allocation10 + $0x4c] sm:$0xf]
    %v372 = vld [vmem:[#allocation10 + $0x50] sm:$0xf]
    %v373 = vld [vmem:[#allocation10 + $0x54] sm:$0xf]
    %v374 = vld [vmem:[#allocation10 + $0x58] sm:$0xf]
    %v375 = vld [vmem:[#allocation10 + $0x5c] sm:$0xf]
    %v376 = vld [vmem:[#allocation10 + $0x60] sm:$0xf]
    %v377 = vld [vmem:[#allocation10 + $0x64] sm:$0xf]
    %v378 = vld [vmem:[#allocation10 + $0x68] sm:$0xf]
    %v379 = vld [vmem:[#allocation10 + $0x6c] sm:$0xf]
    %v380 = vld [vmem:[#allocation10 + $0x70] sm:$0xf]
    %v381 = vld [vmem:[#allocation10 + $0x74] sm:$0xf]
    %v382 = vld [vmem:[#allocation10 + $0x78] sm:$0xf]
    %v383 = vld [vmem:[#allocation10 + $0x7c] sm:$0xf]
    %v384 = vld [vmem:[%s6] sm:$0x1]
    %v386 = vlaneseq
    %v387 = vshrl.u32 %v386, 7
    %v388 = vsub.s32 0, %v387
    %v389 = vrot.slane %v384, %v388
    %v423 = vunpack.c.l.b16 %v352
    %v424 = vunpack.c.l.b16 %v353
    %v425 = vunpack.c.l.b16 %v354
    %v426 = vunpack.c.l.b16 %v355
    %v427 = vunpack.c.l.b16 %v356
    %v428 = vunpack.c.l.b16 %v357
    %v429 = vunpack.c.l.b16 %v358
    %v430 = vunpack.c.l.b16 %v359
    %v431 = vunpack.c.l.b16 %v360
    %v432 = vunpack.c.l.b16 %v361
    %v433 = vunpack.c.l.b16 %v362
    %v434 = vunpack.c.l.b16 %v363
    %v435 = vunpack.c.l.b16 %v364
    %v436 = vunpack.c.l.b16 %v365
    %v437 = vunpack.c.l.b16 %v366
    %v438 = vunpack.c.l.b16 %v367
    %v439 = vunpack.c.l.b16 %v368
    %v440 = vunpack.c.l.b16 %v369
    %v441 = vunpack.c.l.b16 %v370
    %v442 = vunpack.c.l.b16 %v371
    %v443 = vunpack.c.l.b16 %v372
    %v444 = vunpack.c.l.b16 %v373
    %v445 = vunpack.c.l.b16 %v374
    %v446 = vunpack.c.l.b16 %v375
    %v447 = vunpack.c.l.b16 %v376
    %v448 = vunpack.c.l.b16 %v377
    %v449 = vunpack.c.l.b16 %v378
    %v450 = vunpack.c.l.b16 %v379
    %v451 = vunpack.c.l.b16 %v380
    %v452 = vunpack.c.l.b16 %v381
    %v453 = vunpack.c.l.b16 %v382
    %v454 = vunpack.c.l.b16 %v383
    %v455 = vpack.c.b16 %v424, %v423
    %v456 = vpack.c.b16 %v426, %v425
    %v457 = vpack.c.b16 %v428, %v427
    %v458 = vpack.c.b16 %v430, %v429
    %v459 = vpack.c.b16 %v432, %v431
    %v460 = vpack.c.b16 %v434, %v433
    %v461 = vpack.c.b16 %v436, %v435
    %v462 = vpack.c.b16 %v438, %v437
    %v463 = vpack.c.b16 %v440, %v439
    %v464 = vpack.c.b16 %v442, %v441
    %v465 = vpack.c.b16 %v444, %v443
    %v466 = vpack.c.b16 %v446, %v445
    %v467 = vpack.c.b16 %v448, %v447
    %v468 = vpack.c.b16 %v450, %v449
    %v469 = vpack.c.b16 %v452, %v451
    %v470 = vpack.c.b16 %v454, %v453
    %487 = vmatprep.subr.bf16.mxu0 0
    %488 = vmatpush1.bf16.msra.mxu0 %v455
    %489 = vmatprep.subr.bf16.mxu0 0
    %490 = vmatpush1.bf16.msra.mxu0 %v456
    %491 = vmatprep.subr.bf16.mxu0 0
    %492 = vmatpush1.bf16.msra.mxu0 %v457
    %493 = vmatprep.subr.bf16.mxu0 0
    %494 = vmatpush1.bf16.msra.mxu0 %v458
    %495 = vmatprep.subr.bf16.mxu0 0
    %496 = vmatpush1.bf16.msra.mxu0 %v459
    %497 = vmatprep.subr.bf16.mxu0 0
    %498 = vmatpush1.bf16.msra.mxu0 %v460
    %499 = vmatprep.subr.bf16.mxu0 0
    %500 = vmatpush1.bf16.msra.mxu0 %v461
    %501 = vmatprep.subr.bf16.mxu0 0
    %502 = vmatpush1.bf16.msra.mxu0 %v462
    %503 = vmatprep.subr.bf16.mxu0 0
    %504 = vmatpush1.bf16.msra.mxu0 %v463
    %505 = vmatprep.subr.bf16.mxu0 0
    %506 = vmatpush1.bf16.msra.mxu0 %v464
    %507 = vmatprep.subr.bf16.mxu0 0
    %508 = vmatpush1.bf16.msra.mxu0 %v465
    %509 = vmatprep.subr.bf16.mxu0 0
    %510 = vmatpush1.bf16.msra.mxu0 %v466
    %511 = vmatprep.subr.bf16.mxu0 0
    %512 = vmatpush1.bf16.msra.mxu0 %v467
    %513 = vmatprep.subr.bf16.mxu0 0
    %514 = vmatpush1.bf16.msra.mxu0 %v468
    %515 = vmatprep.subr.bf16.mxu0 0
    %516 = vmatpush1.bf16.msra.mxu0 %v469
    %517 = vmatprep.subr.bf16.mxu0 0
    %518 = vmatpush1.bf16.msra.mxu0 %v470
    %519 = vmatprep.mubr.bf16.mxu0 %v351
    %520 = vmatmul.mubr.bf16.gmra.mrb[0].mxu0 %v350
    %v521 = vpop.f32.mrb[0].mxu0
    %v522 = vadd.f32 %v389, %v521
    %v523 = vpop.f32.mrb[0].mxu0
    %v524 = vpop.f32.mrb[0].mxu0
    %v525 = vadd.f32 %v389, %v524
    %v526 = vpop.f32.mrb[0].mxu0
    %527 = vdwg.mxu0
    %v528 = vmax.f32 %v522, 0.0
    %v529 = vmax.f32 %v525, 0.0
    %v530 = vpack.c.bf16 %v529, %v528
    %v531 = vld [vmem:[#allocation11] sm:$0xf]
    %v532 = vld [vmem:[#allocation11 + $0x4] sm:$0xf]
    %v533 = vld [vmem:[#allocation11 + $0x8] sm:$0xf]
    %v534 = vld [vmem:[#allocation11 + $0xc] sm:$0xf]
    %v535 = vld [vmem:[#allocation11 + $0x10] sm:$0xf]
    %v536 = vld [vmem:[#allocation11 + $0x14] sm:$0xf]
    %v537 = vld [vmem:[#allocation11 + $0x18] sm:$0xf]
    %v538 = vld [vmem:[#allocation11 + $0x1c] sm:$0xf]
    %v539 = vld [vmem:[#allocation11 + $0x20] sm:$0xf]
    %v540 = vld [vmem:[#allocation11 + $0x24] sm:$0xf]
    %v541 = vld [vmem:[#allocation11 + $0x28] sm:$0xf]
    %v542 = vld [vmem:[#allocation11 + $0x2c] sm:$0xf]
    %v543 = vld [vmem:[#allocation11 + $0x30] sm:$0xf]
    %v544 = vld [vmem:[#allocation11 + $0x34] sm:$0xf]
    %v545 = vld [vmem:[#allocation11 + $0x38] sm:$0xf]
    %v546 = vld [vmem:[#allocation11 + $0x3c] sm:$0xf]
    %v547 = vld [vmem:[%s8] sm:$0x1]
    %v549 = vlaneseq
    %v550 = vshrl.u32 %v549, 7
    %v551 = vsub.s32 0, %v550
    %v552 = vrot.slane %v547, %v551
    %v570 = vunpack.c.l.b16 %v531
    %v571 = vunpack.c.l.b16 %v532
    %v572 = vunpack.c.l.b16 %v533
    %v573 = vunpack.c.l.b16 %v534
    %v574 = vunpack.c.l.b16 %v535
    %v575 = vunpack.c.l.b16 %v536
    %v576 = vunpack.c.l.b16 %v537
    %v577 = vunpack.c.l.b16 %v538
    %v578 = vunpack.c.l.b16 %v539
    %v579 = vunpack.c.l.b16 %v540
    %v580 = vunpack.c.l.b16 %v541
    %v581 = vunpack.c.l.b16 %v542
    %v582 = vunpack.c.l.b16 %v543
    %v583 = vunpack.c.l.b16 %v544
    %v584 = vunpack.c.l.b16 %v545
    %v585 = vunpack.c.l.b16 %v546
    %v586 = vpack.c.b16 %v571, %v570
    %v587 = vpack.c.b16 %v573, %v572
    %v588 = vpack.c.b16 %v575, %v574
    %v589 = vpack.c.b16 %v577, %v576
    %v590 = vpack.c.b16 %v579, %v578
    %v591 = vpack.c.b16 %v581, %v580
    %v592 = vpack.c.b16 %v583, %v582
    %v593 = vpack.c.b16 %v585, %v584
    %602 = vmatprep.subr.bf16.mxu0 0
    %603 = vmatpush1.bf16.msra.mxu0 %v586
    %604 = vmatprep.subr.bf16.mxu0 0
    %605 = vmatpush1.bf16.msra.mxu0 %v587
    %606 = vmatprep.subr.bf16.mxu0 0
    %607 = vmatpush1.bf16.msra.mxu0 %v588
    %608 = vmatprep.subr.bf16.mxu0 0
    %609 = vmatpush1.bf16.msra.mxu0 %v589
    %610 = vmatprep.subr.bf16.mxu0 0
    %611 = vmatpush1.bf16.msra.mxu0 %v590
    %612 = vmatprep.subr.bf16.mxu0 0
    %613 = vmatpush1.bf16.msra.mxu0 %v591
    %614 = vmatprep.subr.bf16.mxu0 0
    %615 = vmatpush1.bf16.msra.mxu0 %v592
    %616 = vmatprep.subr.bf16.mxu0 0
    %617 = vmatpush1.bf16.msra.mxu0 %v593
    %618 = vmatprep.subr.bf16.mxu0 0
    %619 = vmatpush1.bf16.msra.mxu0 0
    %620 = vmatprep.subr.bf16.mxu0 0
    %621 = vmatpush1.bf16.msra.mxu0 0
    %622 = vmatprep.subr.bf16.mxu0 0
    %623 = vmatpush1.bf16.msra.mxu0 0
    %624 = vmatprep.subr.bf16.mxu0 0
    %625 = vmatpush1.bf16.msra.mxu0 0
    %626 = vmatprep.subr.bf16.mxu0 0
    %627 = vmatpush1.bf16.msra.mxu0 0
    %628 = vmatprep.subr.bf16.mxu0 0
    %629 = vmatpush1.bf16.msra.mxu0 0
    %630 = vmatprep.subr.bf16.mxu0 0
    %631 = vmatpush1.bf16.msra.mxu0 0
    %632 = vmatprep.subr.bf16.mxu0 0
    %633 = vmatpush1.bf16.msra.mxu0 0
    %634 = vmatprep.mubr.bf16.mxu0 0
    %635 = vmatmul.mubr.bf16.gmra.mrb[0].mxu0 %v530
    %v636 = vpop.f32.mrb[0].mxu0
    %v637 = vadd.f32 %v552, %v636
    %v638 = vpop.f32.mrb[0].mxu0
    %v639 = vpop.f32.mrb[0].mxu0
    %v640 = vadd.f32 %v552, %v639
    %v641 = vpop.f32.mrb[0].mxu0
    %642 = vdwg.mxu0
    %v643 = vmax.f32 %v637, 0.0
    %v644 = vmax.f32 %v640, 0.0
    %v645 = vpack.c.bf16 %v644, %v643
    %v646 = vld [vmem:[#allocation13] sm:$0xf]
    %v647 = vld [vmem:[#allocation13 + $0x4] sm:$0xf]
    %v648 = vld [vmem:[#allocation13 + $0x8] sm:$0xf]
    %v649 = vld [vmem:[#allocation13 + $0xc] sm:$0xf]
    %v650 = vld [vmem:[#allocation13 + $0x10] sm:$0xf]
    %v651 = vld [vmem:[#allocation13 + $0x14] sm:$0xf]
    %v652 = vld [vmem:[#allocation13 + $0x18] sm:$0xf]
    %v653 = vld [vmem:[#allocation13 + $0x1c] sm:$0xf]
    %v654 = vld [vmem:[#allocation13 + $0x20] sm:$0xf]
    %v655 = vld [vmem:[#allocation13 + $0x24] sm:$0xf]
    %v656 = vld [vmem:[#allocation13 + $0x28] sm:$0xf]
    %v657 = vld [vmem:[#allocation13 + $0x2c] sm:$0xf]
    %v658 = vld [vmem:[#allocation13 + $0x30] sm:$0xf]
    %v659 = vld [vmem:[#allocation13 + $0x34] sm:$0xf]
    %v660 = vld [vmem:[#allocation13 + $0x38] sm:$0xf]
    %v661 = vld [vmem:[#allocation13 + $0x3c] sm:$0xf]
    %v662 = vld [vmem:[%s10] sm:$0x1]
    %v664 = vlaneseq
    %v665 = vshrl.u32 %v664, 7
    %v666 = vsub.s32 0, %v665
    %v667 = vrot.slane %v662, %v666
    %v685 = vunpack.c.l.b16 %v646
    %v686 = vunpack.c.l.b16 %v647
    %v687 = vunpack.c.l.b16 %v648
    %v688 = vunpack.c.l.b16 %v649
    %v689 = vunpack.c.l.b16 %v650
    %v690 = vunpack.c.l.b16 %v651
    %v691 = vunpack.c.l.b16 %v652
    %v692 = vunpack.c.l.b16 %v653
    %v693 = vunpack.c.l.b16 %v654
    %v694 = vunpack.c.l.b16 %v655
    %v695 = vunpack.c.l.b16 %v656
    %v696 = vunpack.c.l.b16 %v657
    %v697 = vunpack.c.l.b16 %v658
    %v698 = vunpack.c.l.b16 %v659
    %v699 = vunpack.c.l.b16 %v660
    %v700 = vunpack.c.l.b16 %v661
    %v701 = vpack.c.b16 %v686, %v685
    %v702 = vpack.c.b16 %v688, %v687
    %v703 = vpack.c.b16 %v690, %v689
    %v704 = vpack.c.b16 %v692, %v691
    %v705 = vpack.c.b16 %v694, %v693
    %v706 = vpack.c.b16 %v696, %v695
    %v707 = vpack.c.b16 %v698, %v697
    %v708 = vpack.c.b16 %v700, %v699
    %717 = vmatprep.subr.bf16.mxu0 0
    %718 = vmatpush1.bf16.msra.mxu0 %v701
    %719 = vmatprep.subr.bf16.mxu0 0
    %720 = vmatpush1.bf16.msra.mxu0 %v702
    %721 = vmatprep.subr.bf16.mxu0 0
    %722 = vmatpush1.bf16.msra.mxu0 %v703
    %723 = vmatprep.subr.bf16.mxu0 0
    %724 = vmatpush1.bf16.msra.mxu0 %v704
    %725 = vmatprep.subr.bf16.mxu0 0
    %726 = vmatpush1.bf16.msra.mxu0 %v705
    %727 = vmatprep.subr.bf16.mxu0 0
    %728 = vmatpush1.bf16.msra.mxu0 %v706
    %729 = vmatprep.subr.bf16.mxu0 0
    %730 = vmatpush1.bf16.msra.mxu0 %v707
    %731 = vmatprep.subr.bf16.mxu0 0
    %732 = vmatpush1.bf16.msra.mxu0 %v708
    %733 = vmatprep.subr.bf16.mxu0 0
    %734 = vmatpush1.bf16.msra.mxu0 0
    %735 = vmatprep.subr.bf16.mxu0 0
    %736 = vmatpush1.bf16.msra.mxu0 0
    %737 = vmatprep.subr.bf16.mxu0 0
    %738 = vmatpush1.bf16.msra.mxu0 0
    %739 = vmatprep.subr.bf16.mxu0 0
    %740 = vmatpush1.bf16.msra.mxu0 0
    %741 = vmatprep.subr.bf16.mxu0 0
    %742 = vmatpush1.bf16.msra.mxu0 0
    %743 = vmatprep.subr.bf16.mxu0 0
    %744 = vmatpush1.bf16.msra.mxu0 0
    %745 = vmatprep.subr.bf16.mxu0 0
    %746 = vmatpush1.bf16.msra.mxu0 0
    %747 = vmatprep.subr.bf16.mxu0 0
    %748 = vmatpush1.bf16.msra.mxu0 0
    %749 = vmatprep.mubr.bf16.mxu0 0
    %750 = vmatmul.mubr.bf16.gmra.mrb[0].mxu0 %v645
    %v751 = vpop.f32.mrb[0].mxu0
    %v752 = vadd.f32 %v667, %v751
    %v753 = vpop.f32.mrb[0].mxu0
    %v754 = vpop.f32.mrb[0].mxu0
    %v755 = vadd.f32 %v667, %v754
    %v756 = vpop.f32.mrb[0].mxu0
    %757 = vdwg.mxu0
    %v758 = vpack.c.bf16 %v755, %v752
    %v760 = vunpack.c.l.b16 %v758
    %v761 = vunpack.c.h.b16 %v758
    %v762 = vpack.c.b16 %v760, %v760
    %v763 = vpack.c.b16 %v761, %v761
    %766 = vst [vmem:[#allocation14] sm:$0xf] %v762
    %767 = vst [vmem:[#allocation14 + $0x4] sm:$0xf] %v763
    // Predicated region
    $region74: #{tpu_custom_call.1} parent=1 // pred_check
      _
    $region75: #{tpu_custom_call.1} parent=1 // pred_check_branch
      %769 = sbr.rel (0) target = $region77
    $region76: #{tpu_custom_call.1} parent=1 // pred_region
      %s771 = ssub.s32 128, 128
      %772 = vsyncadd [#allocation4], %s771
      %s773 = sshll.u32 [#allocation14], 4
      %s774 = int_to_ptr.vmem [resolvable:$true] %s773
      %779 = dma.vmem_to_hbm [thread:$0]  %s774, 128, %s11, [#allocation4], 64, 64, 4
    $region77: #{tpu_custom_call.1} parent=1 // pred_fallthru
      _
    // Predicated region
    $region78: #{tpu_custom_call.1} parent=1 // pred_check
      _
    $region79: #{tpu_custom_call.1} parent=1 // pred_check_branch
      %781 = sbr.rel (0) target = $region81
    $region80: #{tpu_custom_call.1} parent=1 // pred_region
      %782 = dma.done [#allocation4], 128
    $region81: #{tpu_custom_call.1} parent=1 // pred_fallthru
      _
    %783 = vsyncpa [#allocation3], 1
    %784 = vsyncpa [#allocation6], 1
    %785 = vsyncpa [#allocation9], 1
    %786 = vsyncpa [#allocation12], 1
    %787 = vsyncpa [#allocation4], 1

</llo_original>
